<compile_context>
chip_gen: v7x
topology: tpu7x:2x2x1
jax: 0.10.0
libtpu: 0.0.40
codegen_flags: <defaults>
</compile_context>

<pallas_src>
import functools

import jax
import jax.numpy as jnp
from jax.experimental import pallas as pl
from jax.experimental.pallas import tpu as pltpu

HID = 256                    # fc1 / fc2 width
HEAD = 128                   # per-head hidden width
OUT_PAD = 128                # lane-dense padded output width (Q in cols 0..A-1)
B_ALL = 3 * HID + OUT_PAD    # 896 packed bias lanes
GRID_BATCH_THRESHOLD = 512   # switch to the blocked-batch grid path at/above this
GRID_BLOCK_B = 256           # batch tile for the grid path (VMEM-safe on v5e/v6e/v7x)


def qnetwork_kernel(x_ref, w1_ref, w23_ref, wh2_ref, b_ref, out_ref):
    """4 chained MXU matmuls; the dueling combine is pre-folded into wh2/bh2."""
    f32, bf16 = jnp.float32, jnp.bfloat16

    # Static, lane-aligned views into the packed bias buffer [1, 896].
    b1 = b_ref[:, 0:HID]
    b2 = b_ref[:, HID:2 * HID]
    bh1 = b_ref[:, 2 * HID:3 * HID]
    bq = b_ref[:, 3 * HID:3 * HID + OUT_PAD]

    # fc1 + ReLU                                              [TB, 256]
    x = x_ref[...].astype(bf16)
    h = jnp.dot(x, w1_ref[...], preferred_element_type=f32) + b1
    h = jnp.maximum(h, 0.0)

    # fc2 + ReLU                                              [TB, 256]
    h = jnp.dot(h.astype(bf16), w23_ref[0:HID, :],
                preferred_element_type=f32) + b2
    h = jnp.maximum(h, 0.0)

    # fused head fc1 (adv | val) + ReLU                       [TB, 256]
    hh = jnp.dot(h.astype(bf16), w23_ref[HID:2 * HID, :],
                 preferred_element_type=f32) + bh1
    hh = jnp.maximum(hh, 0.0)

    # fused head fc2 with the dueling combine folded into the weights.
    # Directly produces Q (cols >= action_dim are exactly zero); unmasked,
    # lane-dense store -> no XLU reductions / VPU masking epilogue.
    out_ref[...] = jnp.dot(hh.astype(bf16), wh2_ref[...],
                           preferred_element_type=f32) + bq


@functools.partial(jax.jit, static_argnames=("action_dim", "block_b"))
def _qnetwork_forward_impl(x, w1, w23, wh2c, b_all, *, action_dim, block_b):
    B, S = x.shape
    cost = pl.CostEstimate(
        flops=2 * B * (S * HID + HID * HID + HID * HID + HID * OUT_PAD),
        transcendentals=0,
        bytes_accessed=(int(w1.size) + int(w23.size) + int(wh2c.size)) * 2
        + int(b_all.size) * 4
        + B * (S * x.dtype.itemsize + OUT_PAD * 4),
    )

    if block_b is None:
        # Single-program path: the whole problem (<1 MiB at small B) fits VMEM.
        vmem = pl.BlockSpec(memory_space=pltpu.MemorySpace.VMEM)
        q_pad = pl.pallas_call(
            qnetwork_kernel,
            out_shape=jax.ShapeDtypeStruct((B, OUT_PAD), jnp.float32),
            in_specs=[vmem] * 5,
            out_specs=vmem,
            cost_estimate=cost,
        )(x, w1, w23, wh2c, b_all)
    else:
        # Blocked-batch path: weights stay VMEM-resident (constant index_map),
        # x / out blocks are double-buffered and overlap with compute; the
        # "parallel" batch axis shards work across TensorCores on v7x.
        if B % block_b != 0:
            x = jnp.pad(x, ((0, block_b - B % block_b), (0, 0)))
        Bp = x.shape[0]
        q_pad = pl.pallas_call(
            qnetwork_kernel,
            out_shape=jax.ShapeDtypeStruct((Bp, OUT_PAD), jnp.float32),
            grid=(Bp // block_b,),
            in_specs=[
                pl.BlockSpec((block_b, S), lambda i: (i, 0)),
                pl.BlockSpec((S, HID), lambda i: (0, 0)),
                pl.BlockSpec((2 * HID, HID), lambda i: (0, 0)),
                pl.BlockSpec((HID, OUT_PAD), lambda i: (0, 0)),
                pl.BlockSpec((1, B_ALL), lambda i: (0, 0)),
            ],
            out_specs=pl.BlockSpec((block_b, OUT_PAD), lambda i: (i, 0)),
            compiler_params=pltpu.CompilerParams(
                dimension_semantics=("parallel",)),
            cost_estimate=cost,
        )(x, w1, w23, wh2c, b_all)
        q_pad = q_pad[:B]

    return q_pad[:, :action_dim]


def qnetwork_forward(x, w1, w23, wh2c, b_all, *, action_dim, block_b="auto"):
    """x: [B, state_dim]; (w1, w23, wh2c, b_all) from prepare_params()."""
    if block_b == "auto":
        block_b = GRID_BLOCK_B if x.shape[0] >= GRID_BATCH_THRESHOLD else None
    return _qnetwork_forward_impl(x, w1, w23, wh2c, b_all,
                                  action_dim=action_dim, block_b=block_b)


def prepare_params(params, action_dim):
    """One-time packing of PyTorch-convention weights (call OUTSIDE hot path)."""
    A = action_dim
    assert A + 1 <= OUT_PAD, "action_dim (+ value column) must fit OUT_PAD lanes"

    def T(w):                                   # [out, in] -> [in, out], f32
        return jnp.asarray(w, jnp.float32).T

    w1 = T(params["fc1_w"])                                           # [S, 256]
    w2 = T(params["fc2_w"])                                           # [256, 256]
    wh1 = jnp.concatenate([T(params["adv_fc1_w"]),
                           T(params["val_fc1_w"])], axis=1)           # [256, 256]

    # Block head-2 weight, padded to 128 output lanes:
    # rows 0..127 (adv hidden) -> cols 0..A-1, rows 128..255 (val hidden) -> col A.
    wh2 = jnp.zeros((HID, OUT_PAD), jnp.float32)
    wh2 = wh2.at[:HEAD, :A].set(T(params["adv_fc2_w"]))
    wh2 = wh2.at[HEAD:, A:A + 1].set(T(params["val_fc2_w"]))
    bh2 = jnp.zeros((OUT_PAD,), jnp.float32)
    bh2 = bh2.at[:A].set(jnp.asarray(params["adv_fc2_b"], jnp.float32))
    bh2 = bh2.at[A].set(jnp.asarray(params["val_fc2_b"], jnp.float32)[0])

    # Dueling-combine matrix:  Q = head @ C  with
    #   C[k, j] = [j < A] * (delta_kj - (1/A)*[k < A] + [k == A]).
    # Folded in f32 BEFORE the bf16 cast.
    k = jnp.arange(OUT_PAD)[:, None]
    j = jnp.arange(OUT_PAD)[None, :]
    C = ((k == j).astype(jnp.float32)
         - (1.0 / A) * (k < A).astype(jnp.float32)
         + (k == A).astype(jnp.float32)) * (j < A).astype(jnp.float32)
    wh2c = (wh2 @ C).astype(jnp.bfloat16)                              # [256, 128]
    bh2c = bh2 @ C                                                     # [128] f32

    w1 = w1.astype(jnp.bfloat16)                                       # [S, 256]
    w23 = jnp.concatenate([w2, wh1], axis=0).astype(jnp.bfloat16)      # [512, 256]

    b_all = jnp.concatenate([
        jnp.asarray(params["fc1_b"], jnp.float32),
        jnp.asarray(params["fc2_b"], jnp.float32),
        jnp.asarray(params["adv_fc1_b"], jnp.float32),
        jnp.asarray(params["val_fc1_b"], jnp.float32),
        bh2c,
    ]).reshape(1, -1)                                                  # [1, 896]

    return (jax.device_put(w1), jax.device_put(w23),
            jax.device_put(wh2c), jax.device_put(b_all))


def init_params(key, state_dim, action_dim):
    """Deterministic PyTorch-style (uniform +-1/sqrt(fan_in)) init."""
    layer_shapes = {
        "fc1":     (256, state_dim),
        "fc2":     (256, 256),
        "adv_fc1": (128, 256),
        "adv_fc2": (action_dim, 128),
        "val_fc1": (128, 256),
        "val_fc2": (1, 128),
    }
    params = {}
    keys = jax.random.split(key, 2 * len(layer_shapes))
    for i, (name, (out_f, in_f)) in enumerate(layer_shapes.items()):
        bound = 1.0 / (in_f ** 0.5)
        params[f"{name}_w"] = jax.random.uniform(
            keys[2 * i], (out_f, in_f), jnp.float32, -bound, bound)
        params[f"{name}_b"] = jax.random.uniform(
            keys[2 * i + 1], (out_f,), jnp.float32, -bound, bound)
    return params


def qnetwork_reference(x, params, weight_dtype=jnp.float32):
    """Pure-JAX reference reproducing the PyTorch forward.  With
    weight_dtype=bfloat16 it mirrors the kernel's mixed precision."""
    def lin(h, name):
        w = params[f"{name}_w"].astype(weight_dtype).T
        return jnp.dot(h.astype(weight_dtype), w,
                       preferred_element_type=jnp.float32) + params[f"{name}_b"]

    h = jax.nn.relu(lin(x, "fc1"))
    h = jax.nn.relu(lin(h, "fc2"))
    adv = lin(jax.nn.relu(lin(h, "adv_fc1")), "adv_fc2")
    val = lin(jax.nn.relu(lin(h, "val_fc1")), "val_fc2")
    return val + adv - adv.mean(axis=1, keepdims=True)


if __name__ == "__main__":
    state_dim, action_dim = 16, 4
    key = jax.random.PRNGKey(0)
    pkey, xkey, xkey2 = jax.random.split(key, 3)
    params = init_params(pkey, state_dim, action_dim)

    # One-time packing / transpose / combine-fold / bf16 cast.
    packed = prepare_params(params, action_dim)

    # ---- small batch: single-program (gridless) path -----------------------
    batch = 8
    x = jax.random.normal(xkey, (batch, state_dim), jnp.float32)
    q_vals = qnetwork_forward(x, *packed, action_dim=action_dim)
    q_vals = jax.block_until_ready(q_vals)
    assert q_vals.shape == (batch, action_dim)

    q_ref_bf16 = qnetwork_reference(x, params, weight_dtype=jnp.bfloat16)
    q_ref_f32 = qnetwork_reference(x, params, weight_dtype=jnp.float32)
    assert jnp.allclose(q_vals, q_ref_bf16, atol=1e-2, rtol=1e-2), \
        "mismatch vs bf16 reference (small batch)"
    assert jnp.allclose(q_vals, q_ref_f32, atol=1e-1, rtol=1e-1), \
        "mismatch vs f32 reference (small batch)"

    # ---- larger batch: blocked-batch grid path (weights VMEM-resident) -----
    batch2 = 256
    x2 = jax.random.normal(xkey2, (batch2, state_dim), jnp.float32)
    q_vals2 = qnetwork_forward(x2, *packed, action_dim=action_dim, block_b=128)
    q_vals2 = jax.block_until_ready(q_vals2)
    assert q_vals2.shape == (batch2, action_dim)
    q2_ref_bf16 = qnetwork_reference(x2, params, weight_dtype=jnp.bfloat16)
    assert jnp.allclose(q_vals2, q2_ref_bf16, atol=1e-2, rtol=1e-2), \
        "mismatch vs bf16 reference (grid path)"

    print("KERNEL_OK")
</pallas_src>

<mosaic_0001>
module attributes {stable_mosaic.version = 11 : i64} {
  func.func @qnetwork_kernel(%arg0: memref<8x16xf32, #tpu.memory_space<vmem>>, %arg1: memref<16x256xbf16, #tpu.memory_space<vmem>>, %arg2: memref<512x256xbf16, #tpu.memory_space<vmem>>, %arg3: memref<256x128xbf16, #tpu.memory_space<vmem>>, %arg4: memref<1x896xf32, #tpu.memory_space<vmem>>, %arg5: memref<8x128xf32, #tpu.memory_space<vmem>>) attributes {dimension_semantics = [], scalar_prefetch = 0 : i64, scratch_operands = 0 : i64, tpu.core_type = #tpu.core_type<tc>} {
    %c0 = arith.constant 0 : index
    %c0_0 = arith.constant 0 : index
    %0 = vector.load %arg4[%c0, %c0_0] : memref<1x896xf32, #tpu.memory_space<vmem>>, vector<1x256xf32>
    %c0_1 = arith.constant 0 : index
    %c256 = arith.constant 256 : index
    %1 = vector.load %arg4[%c0_1, %c256] : memref<1x896xf32, #tpu.memory_space<vmem>>, vector<1x256xf32>
    %c0_2 = arith.constant 0 : index
    %c512 = arith.constant 512 : index
    %2 = vector.load %arg4[%c0_2, %c512] : memref<1x896xf32, #tpu.memory_space<vmem>>, vector<1x256xf32>
    %c0_3 = arith.constant 0 : index
    %c768 = arith.constant 768 : index
    %3 = vector.load %arg4[%c0_3, %c768] : memref<1x896xf32, #tpu.memory_space<vmem>>, vector<1x128xf32>
    %c0_4 = arith.constant 0 : index
    %c0_5 = arith.constant 0 : index
    %4 = vector.load %arg0[%c0_4, %c0_5] : memref<8x16xf32, #tpu.memory_space<vmem>>, vector<8x16xf32>
    %5 = arith.truncf %4 : vector<8x16xf32> to vector<8x16xbf16>
    %c0_6 = arith.constant 0 : index
    %c0_7 = arith.constant 0 : index
    %6 = vector.load %arg1[%c0_6, %c0_7] : memref<16x256xbf16, #tpu.memory_space<vmem>>, vector<16x256xbf16>
    %cst = arith.constant dense<0.000000e+00> : vector<8x256xf32>
    %7 = tpu.matmul %5, %6, %cst {dimension_numbers = #tpu.dot_dimension_numbers<[1], [0], [0], [1], [0, 0, 1, 1], [], []>} : vector<8x16xbf16>, vector<16x256xbf16>, vector<8x256xf32> -> vector<8x256xf32>
    %8 = vector.broadcast %0 : vector<1x256xf32> to vector<8x256xf32>
    %9 = arith.addf %7, %8 : vector<8x256xf32>
    %cst_8 = arith.constant 0.000000e+00 : f32
    %10 = vector.broadcast %cst_8 : f32 to vector<8x256xf32>
    %11 = arith.maximumf %9, %10 : vector<8x256xf32>
    %12 = arith.truncf %11 : vector<8x256xf32> to vector<8x256xbf16>
    %c0_9 = arith.constant 0 : index
    %c0_10 = arith.constant 0 : index
    %13 = vector.load %arg2[%c0_9, %c0_10] : memref<512x256xbf16, #tpu.memory_space<vmem>>, vector<256x256xbf16>
    %cst_11 = arith.constant dense<0.000000e+00> : vector<8x256xf32>
    %14 = tpu.matmul %12, %13, %cst_11 {dimension_numbers = #tpu.dot_dimension_numbers<[1], [0], [0], [1], [0, 0, 1, 1], [], []>} : vector<8x256xbf16>, vector<256x256xbf16>, vector<8x256xf32> -> vector<8x256xf32>
    %15 = vector.broadcast %1 : vector<1x256xf32> to vector<8x256xf32>
    %16 = arith.addf %14, %15 : vector<8x256xf32>
    %cst_12 = arith.constant 0.000000e+00 : f32
    %17 = vector.broadcast %cst_12 : f32 to vector<8x256xf32>
    %18 = arith.maximumf %16, %17 : vector<8x256xf32>
    %19 = arith.truncf %18 : vector<8x256xf32> to vector<8x256xbf16>
    %c256_13 = arith.constant 256 : index
    %c0_14 = arith.constant 0 : index
    %20 = vector.load %arg2[%c256_13, %c0_14] : memref<512x256xbf16, #tpu.memory_space<vmem>>, vector<256x256xbf16>
    %cst_15 = arith.constant dense<0.000000e+00> : vector<8x256xf32>
    %21 = tpu.matmul %19, %20, %cst_15 {dimension_numbers = #tpu.dot_dimension_numbers<[1], [0], [0], [1], [0, 0, 1, 1], [], []>} : vector<8x256xbf16>, vector<256x256xbf16>, vector<8x256xf32> -> vector<8x256xf32>
    %22 = vector.broadcast %2 : vector<1x256xf32> to vector<8x256xf32>
    %23 = arith.addf %21, %22 : vector<8x256xf32>
    %cst_16 = arith.constant 0.000000e+00 : f32
    %24 = vector.broadcast %cst_16 : f32 to vector<8x256xf32>
    %25 = arith.maximumf %23, %24 : vector<8x256xf32>
    %26 = arith.truncf %25 : vector<8x256xf32> to vector<8x256xbf16>
    %c0_17 = arith.constant 0 : index
    %c0_18 = arith.constant 0 : index
    %27 = vector.load %arg3[%c0_17, %c0_18] : memref<256x128xbf16, #tpu.memory_space<vmem>>, vector<256x128xbf16>
    %cst_19 = arith.constant dense<0.000000e+00> : vector<8x128xf32>
    %28 = tpu.matmul %26, %27, %cst_19 {dimension_numbers = #tpu.dot_dimension_numbers<[1], [0], [0], [1], [0, 0, 1, 1], [], []>} : vector<8x256xbf16>, vector<256x128xbf16>, vector<8x128xf32> -> vector<8x128xf32>
    %29 = vector.broadcast %3 : vector<1x128xf32> to vector<8x128xf32>
    %30 = arith.addf %28, %29 : vector<8x128xf32>
    %c0_20 = arith.constant 0 : index
    %c0_21 = arith.constant 0 : index
    %31 = vector.load %arg5[%c0_20, %c0_21] : memref<8x128xf32, #tpu.memory_space<vmem>>, vector<8x128xf32>
    tpu.vector_store %arg5[%c0_20, %c0_21], %30 {strides = array<i32>} : memref<8x128xf32, #tpu.memory_space<vmem>>, vector<8x128xf32>,
    return
  }
}

</mosaic_0001>

<llo_original>
// kernel: _qnetwork_forward_impl.1
$region0: #{_qnetwork_forward_impl.1}
  #allocation0 [shape = 'u32[]', space=smem, size = 0x4, offset = 0x4, fixed_abs, tag = 'smem constant byte address 0x4 - core index']
  #allocation1 [shape = 'u32[144,128]{1,0:T(1,128)}', space=vmem, size = 0x12000, scoped, tag = 'internal scratch']
  %s0 = inlined_call_operand.hbm [shape: f32[8,16], index: 0, kind: input, shape index: {}]
  %s1 = inlined_call_operand.hbm [shape: bf16[16,256], index: 1, kind: input, shape index: {}]
  %s2 = inlined_call_operand.hbm [shape: bf16[512,256], index: 2, kind: input, shape index: {}]
  %s3 = inlined_call_operand.hbm [shape: bf16[256,128], index: 3, kind: input, shape index: {}]
  %s4 = inlined_call_operand.vmem [shape: f32[1,896], index: 4, kind: input, shape index: {}]
  %s5 = inlined_call_operand.vmem [shape: f32[8,128], index: 5, kind: output, shape index: {}]
  %s6 = sld [smem:[#allocation0]]
  $region46: #{_qnetwork_forward_impl.1} parent=0
    _
  %s8 = ssub.s32 1, %s6
  %s9 = scalar_select 0, %s8, %s6
  $region1: #{_qnetwork_forward_impl.1} parent=0
    #allocation2 [shape = 'u8[4096]{0}', space=vmem, size = 0x1000, scoped, tag = 'input window, operand 0, single buffered']
    #allocation3 [shape = 's32[1]{0}', space=sflag, size = 0x4, scoped, tag = 'scoped memory for _qnetwork_forward_impl.1']
    #allocation4 [shape = 'u8[8192]{0}', space=vmem, size = 0x2000, scoped, tag = 'input window, operand 1, single buffered']
    #allocation5 [shape = 's32[1]{0}', space=sflag, size = 0x4, scoped, tag = 'scoped memory for _qnetwork_forward_impl.1']
    #allocation6 [shape = 'u8[262144]{0}', space=vmem, size = 0x40000, scoped, tag = 'input window, operand 2, single buffered']
    #allocation7 [shape = 'u8[65536]{0}', space=vmem, size = 0x10000, scoped, tag = 'input window, operand 3, single buffered']
    #allocation8 [shape = 's32[1]{0}', space=sflag, size = 0x4, scoped, tag = 'scoped memory for _qnetwork_forward_impl.1']
    %10 = vsyncpa [#allocation3], 0
    %11 = vsyncpa [#allocation5], 0
    %12 = vsyncpa [#allocation8], 0
    // Predicated region
    $region2: #{_qnetwork_forward_impl.1} parent=1 // pred_check
      _
    $region3: #{_qnetwork_forward_impl.1} parent=1 // pred_check_branch
      %14 = sbr.rel (0) target = $region5
    $region4: #{_qnetwork_forward_impl.1} parent=1 // pred_region
      %s16 = ssub.s32 128, 128
      %17 = vsyncadd [#allocation3], %s16
      %s19 = sshll.u32 [#allocation2], 4
      %s20 = int_to_ptr.vmem [resolvable:$true] %s19
      %22 = dma.hbm_to_vmem [thread:$0]  %s0, 128, %s20, [#allocation3]
    $region5: #{_qnetwork_forward_impl.1} parent=1 // pred_fallthru
      _
    // Predicated region
    $region6: #{_qnetwork_forward_impl.1} parent=1 // pred_check
      _
    $region7: #{_qnetwork_forward_impl.1} parent=1 // pred_check_branch
      %24 = sbr.rel (0) target = $region9
    $region8: #{_qnetwork_forward_impl.1} parent=1 // pred_region
      %s26 = ssub.s32 256, 256
      %27 = vsyncadd [#allocation5], %s26
      %s28 = sshll.u32 [#allocation4], 4
      %s29 = int_to_ptr.vmem [resolvable:$true] %s28
      %34 = dma.hbm_to_vmem [thread:$0]  %s1, 256, %s29, [#allocation5], 128, 128, 8
    $region9: #{_qnetwork_forward_impl.1} parent=1 // pred_fallthru
      _
    // Predicated region
    $region10: #{_qnetwork_forward_impl.1} parent=1 // pred_check
      _
    $region11: #{_qnetwork_forward_impl.1} parent=1 // pred_check_branch
      %36 = sbr.rel (0) target = $region13
    $region12: #{_qnetwork_forward_impl.1} parent=1 // pred_region
      %s38 = ssub.s32 8192, 8192
      %39 = vsyncadd [#allocation5], %s38
      %s40 = sshll.u32 [#allocation6], 4
      %s41 = int_to_ptr.vmem [resolvable:$true] %s40
      %46 = dma.hbm_to_vmem [thread:$0]  %s2, 8192, %s41, [#allocation5], 128, 128, 8
    $region13: #{_qnetwork_forward_impl.1} parent=1 // pred_fallthru
      _
    // Predicated region
    $region14: #{_qnetwork_forward_impl.1} parent=1 // pred_check
      _
    $region15: #{_qnetwork_forward_impl.1} parent=1 // pred_check_branch
      %48 = sbr.rel (0) target = $region17
    $region16: #{_qnetwork_forward_impl.1} parent=1 // pred_region
      %s50 = ssub.s32 2048, 2048
      %51 = vsyncadd [#allocation8], %s50
      %s52 = sshll.u32 [#allocation7], 4
      %s53 = int_to_ptr.vmem [resolvable:$true] %s52
      %58 = dma.hbm_to_vmem [thread:$0]  %s3, 2048, %s53, [#allocation8], 64, 64, 4
    $region17: #{_qnetwork_forward_impl.1} parent=1 // pred_fallthru
      _
    // Predicated region
    $region18: #{_qnetwork_forward_impl.1} parent=1 // pred_check
      _
    $region19: #{_qnetwork_forward_impl.1} parent=1 // pred_check_branch
      %60 = sbr.rel (0) target = $region21
    $region20: #{_qnetwork_forward_impl.1} parent=1 // pred_region
      _
    $region21: #{_qnetwork_forward_impl.1} parent=1 // pred_fallthru
      _
    // Predicated region
    $region22: #{_qnetwork_forward_impl.1} parent=1 // pred_check
      _
    $region23: #{_qnetwork_forward_impl.1} parent=1 // pred_check_branch
      %62 = sbr.rel (0) target = $region25
    $region24: #{_qnetwork_forward_impl.1} parent=1 // pred_region
      %63 = dma.done [#allocation3], 128
    $region25: #{_qnetwork_forward_impl.1} parent=1 // pred_fallthru
      _
    // Predicated region
    $region26: #{_qnetwork_forward_impl.1} parent=1 // pred_check
      _
    $region27: #{_qnetwork_forward_impl.1} parent=1 // pred_check_branch
      %65 = sbr.rel (0) target = $region29
    $region28: #{_qnetwork_forward_impl.1} parent=1 // pred_region
      %66 = dma.done [#allocation5], 256
    $region29: #{_qnetwork_forward_impl.1} parent=1 // pred_fallthru
      _
    // Predicated region
    $region30: #{_qnetwork_forward_impl.1} parent=1 // pred_check
      _
    $region31: #{_qnetwork_forward_impl.1} parent=1 // pred_check_branch
      %68 = sbr.rel (0) target = $region33
    $region32: #{_qnetwork_forward_impl.1} parent=1 // pred_region
      %69 = dma.done [#allocation5], 8192
    $region33: #{_qnetwork_forward_impl.1} parent=1 // pred_fallthru
      _
    // Predicated region
    $region34: #{_qnetwork_forward_impl.1} parent=1 // pred_check
      _
    $region35: #{_qnetwork_forward_impl.1} parent=1 // pred_check_branch
      %71 = sbr.rel (0) target = $region37
    $region36: #{_qnetwork_forward_impl.1} parent=1 // pred_region
      %72 = dma.done [#allocation8], 2048
    $region37: #{_qnetwork_forward_impl.1} parent=1 // pred_fallthru
      _
    %v74 = vld [vmem:[%s4] sm:$0x3]
    %v75 = vld [vmem:[%s4 + $0x2] sm:$0x3]
    %v76 = vld [vmem:[%s4 + $0x4] sm:$0x3]
    %v77 = vld [vmem:[%s4 + $0x6] sm:$0x1]
    %v78 = vld [vmem:[#allocation2] sm:$0xff]
    %v79 = vpack.c.bf16 %v78, %v78
    %v80 = vld [vmem:[#allocation4] sm:$0xff]
    %v81 = vld [vmem:[#allocation4 + $0x8] sm:$0xff]
    %v83 = vlaneseq
    %v84 = vshrl.u32 %v83, 7
    %v85 = vsub.s32 0, %v84
    %v86 = vrot.slane %v74, %v85
    %v87 = vlaneseq
    %v88 = vshrl.u32 %v87, 7
    %v89 = vsub.s32 1, %v88
    %v90 = vrot.slane %v74, %v89
    %v95 = vunpack.c.l.b16 %v80
    %v96 = vunpack.c.h.b16 %v80
    %v97 = vunpack.c.l.b16 %v81
    %v98 = vunpack.c.h.b16 %v81
    %v99 = vpack.c.b16 %v97, %v95
    %v100 = vpack.c.b16 %v98, %v96
    %vm103 = vcmask 130048
    %v105 = vsel %vm103, %v79, 0
    %107 = vmatprep.subr.bf16.mxu0 %v100
    %108 = vmatpush1.bf16.msra.mxu0 %v99
    %109 = vmatprep.subr.bf16.mxu0 0
    %110 = vmatpush1.bf16.msra.mxu0 0
    %111 = vmatprep.subr.bf16.mxu0 0
    %112 = vmatpush1.bf16.msra.mxu0 0
    %113 = vmatprep.subr.bf16.mxu0 0
    %114 = vmatpush1.bf16.msra.mxu0 0
    %115 = vmatprep.subr.bf16.mxu0 0
    %116 = vmatpush1.bf16.msra.mxu0 0
    %117 = vmatprep.subr.bf16.mxu0 0
    %118 = vmatpush1.bf16.msra.mxu0 0
    %119 = vmatprep.subr.bf16.mxu0 0
    %120 = vmatpush1.bf16.msra.mxu0 0
    %121 = vmatprep.subr.bf16.mxu0 0
    %122 = vmatpush1.bf16.msra.mxu0 0
    %123 = vmatprep.subr.bf16.mxu0 0
    %124 = vmatpush1.bf16.msra.mxu0 0
    %125 = vmatprep.subr.bf16.mxu0 0
    %126 = vmatpush1.bf16.msra.mxu0 0
    %127 = vmatprep.subr.bf16.mxu0 0
    %128 = vmatpush1.bf16.msra.mxu0 0
    %129 = vmatprep.subr.bf16.mxu0 0
    %130 = vmatpush1.bf16.msra.mxu0 0
    %131 = vmatprep.subr.bf16.mxu0 0
    %132 = vmatpush1.bf16.msra.mxu0 0
    %133 = vmatprep.subr.bf16.mxu0 0
    %134 = vmatpush1.bf16.msra.mxu0 0
    %135 = vmatprep.subr.bf16.mxu0 0
    %136 = vmatpush1.bf16.msra.mxu0 0
    %137 = vmatprep.subr.bf16.mxu0 0
    %138 = vmatpush1.bf16.msra.mxu0 0
    %139 = vmatprep.mubr.bf16.mxu0 0
    %140 = vmatmul.mubr.bf16.gmra.mrb[0].mxu0 %v105
    %v141 = vpop.f32.mrb[0].mxu0
    %v142 = vadd.f32 %v86, %v141
    %v143 = vpop.f32.mrb[0].mxu0
    %v144 = vadd.f32 %v90, %v143
    %v145 = vpop.f32.mrb[0].mxu0
    %v146 = vpop.f32.mrb[0].mxu0
    %147 = vdwg.mxu0
    %v148 = vmax.f32 %v142, 0.0
    %v149 = vmax.f32 %v144, 0.0
    %v150 = vpack.c.bf16 %v148, %v148
    %v151 = vpack.c.bf16 %v149, %v149
    %v152 = vld [vmem:[#allocation6] sm:$0xff]
    %v153 = vld [vmem:[#allocation6 + $0x8] sm:$0xff]
    %v154 = vld [vmem:[#allocation6 + $0x10] sm:$0xff]
    %v155 = vld [vmem:[#allocation6 + $0x18] sm:$0xff]
    %v156 = vld [vmem:[#allocation6 + $0x20] sm:$0xff]
    %v157 = vld [vmem:[#allocation6 + $0x28] sm:$0xff]
    %v158 = vld [vmem:[#allocation6 + $0x30] sm:$0xff]
    %v159 = vld [vmem:[#allocation6 + $0x38] sm:$0xff]
    %v160 = vld [vmem:[#allocation6 + $0x40] sm:$0xff]
    %v161 = vld [vmem:[#allocation6 + $0x48] sm:$0xff]
    %v162 = vld [vmem:[#allocation6 + $0x50] sm:$0xff]
    %v163 = vld [vmem:[#allocation6 + $0x58] sm:$0xff]
    %v164 = vld [vmem:[#allocation6 + $0x60] sm:$0xff]
    %v165 = vld [vmem:[#allocation6 + $0x68] sm:$0xff]
    %v166 = vld [vmem:[#allocation6 + $0x70] sm:$0xff]
    %v167 = vld [vmem:[#allocation6 + $0x78] sm:$0xff]
    %v168 = vld [vmem:[#allocation6 + $0x80] sm:$0xff]
    %v169 = vld [vmem:[#allocation6 + $0x88] sm:$0xff]
    %v170 = vld [vmem:[#allocation6 + $0x90] sm:$0xff]
    %v171 = vld [vmem:[#allocation6 + $0x98] sm:$0xff]
    %v172 = vld [vmem:[#allocation6 + $0xa0] sm:$0xff]
    %v173 = vld [vmem:[#allocation6 + $0xa8] sm:$0xff]
    %v174 = vld [vmem:[#allocation6 + $0xb0] sm:$0xff]
    %v175 = vld [vmem:[#allocation6 + $0xb8] sm:$0xff]
    %v176 = vld [vmem:[#allocation6 + $0xc0] sm:$0xff]
    %v177 = vld [vmem:[#allocation6 + $0xc8] sm:$0xff]
    %v178 = vld [vmem:[#allocation6 + $0xd0] sm:$0xff]
    %v179 = vld [vmem:[#allocation6 + $0xd8] sm:$0xff]
    %v180 = vld [vmem:[#allocation6 + $0xe0] sm:$0xff]
    %v181 = vld [vmem:[#allocation6 + $0xe8] sm:$0xff]
    %v182 = vld [vmem:[#allocation6 + $0xf0] sm:$0xff]
    %v183 = vld [vmem:[#allocation6 + $0xf8] sm:$0xff]
    %v185 = vlaneseq
    %v186 = vshrl.u32 %v185, 7
    %v187 = vsub.s32 0, %v186
    %v188 = vrot.slane %v75, %v187
    %v189 = vlaneseq
    %v190 = vshrl.u32 %v189, 7
    %v191 = vsub.s32 1, %v190
    %v192 = vrot.slane %v75, %v191
    %v227 = vunpack.c.l.b16 %v152
    %v228 = vunpack.c.h.b16 %v152
    %v229 = vunpack.c.l.b16 %v153
    %v230 = vunpack.c.h.b16 %v153
    %v231 = vunpack.c.l.b16 %v154
    %v232 = vunpack.c.h.b16 %v154
    %v233 = vunpack.c.l.b16 %v155
    %v234 = vunpack.c.h.b16 %v155
    %v235 = vunpack.c.l.b16 %v156
    %v236 = vunpack.c.h.b16 %v156
    %v237 = vunpack.c.l.b16 %v157
    %v238 = vunpack.c.h.b16 %v157
    %v239 = vunpack.c.l.b16 %v158
    %v240 = vunpack.c.h.b16 %v158
    %v241 = vunpack.c.l.b16 %v159
    %v242 = vunpack.c.h.b16 %v159
    %v243 = vunpack.c.l.b16 %v160
    %v244 = vunpack.c.h.b16 %v160
    %v245 = vunpack.c.l.b16 %v161
    %v246 = vunpack.c.h.b16 %v161
    %v247 = vunpack.c.l.b16 %v162
    %v248 = vunpack.c.h.b16 %v162
    %v249 = vunpack.c.l.b16 %v163
    %v250 = vunpack.c.h.b16 %v163
    %v251 = vunpack.c.l.b16 %v164
    %v252 = vunpack.c.h.b16 %v164
    %v253 = vunpack.c.l.b16 %v165
    %v254 = vunpack.c.h.b16 %v165
    %v255 = vunpack.c.l.b16 %v166
    %v256 = vunpack.c.h.b16 %v166
    %v257 = vunpack.c.l.b16 %v167
    %v258 = vunpack.c.h.b16 %v167
    %v259 = vunpack.c.l.b16 %v168
    %v260 = vunpack.c.h.b16 %v168
    %v261 = vunpack.c.l.b16 %v169
    %v262 = vunpack.c.h.b16 %v169
    %v263 = vunpack.c.l.b16 %v170
    %v264 = vunpack.c.h.b16 %v170
    %v265 = vunpack.c.l.b16 %v171
    %v266 = vunpack.c.h.b16 %v171
    %v267 = vunpack.c.l.b16 %v172
    %v268 = vunpack.c.h.b16 %v172
    %v269 = vunpack.c.l.b16 %v173
    %v270 = vunpack.c.h.b16 %v173
    %v271 = vunpack.c.l.b16 %v174
    %v272 = vunpack.c.h.b16 %v174
    %v273 = vunpack.c.l.b16 %v175
    %v274 = vunpack.c.h.b16 %v175
    %v275 = vunpack.c.l.b16 %v176
    %v276 = vunpack.c.h.b16 %v176
    %v277 = vunpack.c.l.b16 %v177
    %v278 = vunpack.c.h.b16 %v177
    %v279 = vunpack.c.l.b16 %v178
    %v280 = vunpack.c.h.b16 %v178
    %v281 = vunpack.c.l.b16 %v179
    %v282 = vunpack.c.h.b16 %v179
    %v283 = vunpack.c.l.b16 %v180
    %v284 = vunpack.c.h.b16 %v180
    %v285 = vunpack.c.l.b16 %v181
    %v286 = vunpack.c.h.b16 %v181
    %v287 = vunpack.c.l.b16 %v182
    %v288 = vunpack.c.h.b16 %v182
    %v289 = vunpack.c.l.b16 %v183
    %v290 = vunpack.c.h.b16 %v183
    %v291 = vpack.c.b16 %v229, %v227
    %v292 = vpack.c.b16 %v230, %v228
    %v293 = vpack.c.b16 %v233, %v231
    %v294 = vpack.c.b16 %v234, %v232
    %v295 = vpack.c.b16 %v237, %v235
    %v296 = vpack.c.b16 %v238, %v236
    %v297 = vpack.c.b16 %v241, %v239
    %v298 = vpack.c.b16 %v242, %v240
    %v299 = vpack.c.b16 %v245, %v243
    %v300 = vpack.c.b16 %v246, %v244
    %v301 = vpack.c.b16 %v249, %v247
    %v302 = vpack.c.b16 %v250, %v248
    %v303 = vpack.c.b16 %v253, %v251
    %v304 = vpack.c.b16 %v254, %v252
    %v305 = vpack.c.b16 %v257, %v255
    %v306 = vpack.c.b16 %v258, %v256
    %v307 = vpack.c.b16 %v261, %v259
    %v308 = vpack.c.b16 %v262, %v260
    %v309 = vpack.c.b16 %v265, %v263
    %v310 = vpack.c.b16 %v266, %v264
    %v311 = vpack.c.b16 %v269, %v267
    %v312 = vpack.c.b16 %v270, %v268
    %v313 = vpack.c.b16 %v273, %v271
    %v314 = vpack.c.b16 %v274, %v272
    %v315 = vpack.c.b16 %v277, %v275
    %v316 = vpack.c.b16 %v278, %v276
    %v317 = vpack.c.b16 %v281, %v279
    %v318 = vpack.c.b16 %v282, %v280
    %v319 = vpack.c.b16 %v285, %v283
    %v320 = vpack.c.b16 %v286, %v284
    %v321 = vpack.c.b16 %v289, %v287
    %v322 = vpack.c.b16 %v290, %v288
    %355 = vmatprep.subr.bf16.mxu0 %v292
    %356 = vmatpush1.bf16.msra.mxu0 %v291
    %357 = vmatprep.subr.bf16.mxu0 %v294
    %358 = vmatpush1.bf16.msra.mxu0 %v293
    %359 = vmatprep.subr.bf16.mxu0 %v296
    %360 = vmatpush1.bf16.msra.mxu0 %v295
    %361 = vmatprep.subr.bf16.mxu0 %v298
    %362 = vmatpush1.bf16.msra.mxu0 %v297
    %363 = vmatprep.subr.bf16.mxu0 %v300
    %364 = vmatpush1.bf16.msra.mxu0 %v299
    %365 = vmatprep.subr.bf16.mxu0 %v302
    %366 = vmatpush1.bf16.msra.mxu0 %v301
    %367 = vmatprep.subr.bf16.mxu0 %v304
    %368 = vmatpush1.bf16.msra.mxu0 %v303
    %369 = vmatprep.subr.bf16.mxu0 %v306
    %370 = vmatpush1.bf16.msra.mxu0 %v305
    %371 = vmatprep.subr.bf16.mxu0 %v308
    %372 = vmatpush1.bf16.msra.mxu0 %v307
    %373 = vmatprep.subr.bf16.mxu0 %v310
    %374 = vmatpush1.bf16.msra.mxu0 %v309
    %375 = vmatprep.subr.bf16.mxu0 %v312
    %376 = vmatpush1.bf16.msra.mxu0 %v311
    %377 = vmatprep.subr.bf16.mxu0 %v314
    %378 = vmatpush1.bf16.msra.mxu0 %v313
    %379 = vmatprep.subr.bf16.mxu0 %v316
    %380 = vmatpush1.bf16.msra.mxu0 %v315
    %381 = vmatprep.subr.bf16.mxu0 %v318
    %382 = vmatpush1.bf16.msra.mxu0 %v317
    %383 = vmatprep.subr.bf16.mxu0 %v320
    %384 = vmatpush1.bf16.msra.mxu0 %v319
    %385 = vmatprep.subr.bf16.mxu0 %v322
    %386 = vmatpush1.bf16.msra.mxu0 %v321
    %387 = vmatprep.mubr.bf16.mxu0 %v151
    %388 = vmatmul.mubr.bf16.gmra.mrb[0].mxu0 %v150
    %v389 = vpop.f32.mrb[0].mxu0
    %v390 = vadd.f32 %v188, %v389
    %v391 = vpop.f32.mrb[0].mxu0
    %v392 = vadd.f32 %v192, %v391
    %v393 = vpop.f32.mrb[0].mxu0
    %v394 = vpop.f32.mrb[0].mxu0
    %395 = vdwg.mxu0
    %v396 = vmax.f32 %v390, 0.0
    %v397 = vmax.f32 %v392, 0.0
    %v398 = vpack.c.bf16 %v396, %v396
    %v399 = vpack.c.bf16 %v397, %v397
    %v400 = vld [vmem:[#allocation6 + $0x100] sm:$0xff]
    %v401 = vld [vmem:[#allocation6 + $0x108] sm:$0xff]
    %v402 = vld [vmem:[#allocation6 + $0x110] sm:$0xff]
    %v403 = vld [vmem:[#allocation6 + $0x118] sm:$0xff]
    %v404 = vld [vmem:[#allocation6 + $0x120] sm:$0xff]
    %v405 = vld [vmem:[#allocation6 + $0x128] sm:$0xff]
    %v406 = vld [vmem:[#allocation6 + $0x130] sm:$0xff]
    %v407 = vld [vmem:[#allocation6 + $0x138] sm:$0xff]
    %v408 = vld [vmem:[#allocation6 + $0x140] sm:$0xff]
    %v409 = vld [vmem:[#allocation6 + $0x148] sm:$0xff]
    %v410 = vld [vmem:[#allocation6 + $0x150] sm:$0xff]
    %v411 = vld [vmem:[#allocation6 + $0x158] sm:$0xff]
    %v412 = vld [vmem:[#allocation6 + $0x160] sm:$0xff]
    %v413 = vld [vmem:[#allocation6 + $0x168] sm:$0xff]
    %v414 = vld [vmem:[#allocation6 + $0x170] sm:$0xff]
    %v415 = vld [vmem:[#allocation6 + $0x178] sm:$0xff]
    %v416 = vld [vmem:[#allocation6 + $0x180] sm:$0xff]
    %v417 = vld [vmem:[#allocation6 + $0x188] sm:$0xff]
    %v418 = vld [vmem:[#allocation6 + $0x190] sm:$0xff]
    %v419 = vld [vmem:[#allocation6 + $0x198] sm:$0xff]
    %v420 = vld [vmem:[#allocation6 + $0x1a0] sm:$0xff]
    %v421 = vld [vmem:[#allocation6 + $0x1a8] sm:$0xff]
    %v422 = vld [vmem:[#allocation6 + $0x1b0] sm:$0xff]
    %v423 = vld [vmem:[#allocation6 + $0x1b8] sm:$0xff]
    %v424 = vld [vmem:[#allocation6 + $0x1c0] sm:$0xff]
    %v425 = vld [vmem:[#allocation6 + $0x1c8] sm:$0xff]
    %v426 = vld [vmem:[#allocation6 + $0x1d0] sm:$0xff]
    %v427 = vld [vmem:[#allocation6 + $0x1d8] sm:$0xff]
    %v428 = vld [vmem:[#allocation6 + $0x1e0] sm:$0xff]
    %v429 = vld [vmem:[#allocation6 + $0x1e8] sm:$0xff]
    %v430 = vld [vmem:[#allocation6 + $0x1f0] sm:$0xff]
    %v431 = vld [vmem:[#allocation6 + $0x1f8] sm:$0xff]
    %v433 = vlaneseq
    %v434 = vshrl.u32 %v433, 7
    %v435 = vsub.s32 0, %v434
    %v436 = vrot.slane %v76, %v435
    %v437 = vlaneseq
    %v438 = vshrl.u32 %v437, 7
    %v439 = vsub.s32 1, %v438
    %v440 = vrot.slane %v76, %v439
    %v475 = vunpack.c.l.b16 %v400
    %v476 = vunpack.c.h.b16 %v400
    %v477 = vunpack.c.l.b16 %v401
    %v478 = vunpack.c.h.b16 %v401
    %v479 = vunpack.c.l.b16 %v402
    %v480 = vunpack.c.h.b16 %v402
    %v481 = vunpack.c.l.b16 %v403
    %v482 = vunpack.c.h.b16 %v403
    %v483 = vunpack.c.l.b16 %v404
    %v484 = vunpack.c.h.b16 %v404
    %v485 = vunpack.c.l.b16 %v405
    %v486 = vunpack.c.h.b16 %v405
    %v487 = vunpack.c.l.b16 %v406
    %v488 = vunpack.c.h.b16 %v406
    %v489 = vunpack.c.l.b16 %v407
    %v490 = vunpack.c.h.b16 %v407
    %v491 = vunpack.c.l.b16 %v408
    %v492 = vunpack.c.h.b16 %v408
    %v493 = vunpack.c.l.b16 %v409
    %v494 = vunpack.c.h.b16 %v409
    %v495 = vunpack.c.l.b16 %v410
    %v496 = vunpack.c.h.b16 %v410
    %v497 = vunpack.c.l.b16 %v411
    %v498 = vunpack.c.h.b16 %v411
    %v499 = vunpack.c.l.b16 %v412
    %v500 = vunpack.c.h.b16 %v412
    %v501 = vunpack.c.l.b16 %v413
    %v502 = vunpack.c.h.b16 %v413
    %v503 = vunpack.c.l.b16 %v414
    %v504 = vunpack.c.h.b16 %v414
    %v505 = vunpack.c.l.b16 %v415
    %v506 = vunpack.c.h.b16 %v415
    %v507 = vunpack.c.l.b16 %v416
    %v508 = vunpack.c.h.b16 %v416
    %v509 = vunpack.c.l.b16 %v417
    %v510 = vunpack.c.h.b16 %v417
    %v511 = vunpack.c.l.b16 %v418
    %v512 = vunpack.c.h.b16 %v418
    %v513 = vunpack.c.l.b16 %v419
    %v514 = vunpack.c.h.b16 %v419
    %v515 = vunpack.c.l.b16 %v420
    %v516 = vunpack.c.h.b16 %v420
    %v517 = vunpack.c.l.b16 %v421
    %v518 = vunpack.c.h.b16 %v421
    %v519 = vunpack.c.l.b16 %v422
    %v520 = vunpack.c.h.b16 %v422
    %v521 = vunpack.c.l.b16 %v423
    %v522 = vunpack.c.h.b16 %v423
    %v523 = vunpack.c.l.b16 %v424
    %v524 = vunpack.c.h.b16 %v424
    %v525 = vunpack.c.l.b16 %v425
    %v526 = vunpack.c.h.b16 %v425
    %v527 = vunpack.c.l.b16 %v426
    %v528 = vunpack.c.h.b16 %v426
    %v529 = vunpack.c.l.b16 %v427
    %v530 = vunpack.c.h.b16 %v427
    %v531 = vunpack.c.l.b16 %v428
    %v532 = vunpack.c.h.b16 %v428
    %v533 = vunpack.c.l.b16 %v429
    %v534 = vunpack.c.h.b16 %v429
    %v535 = vunpack.c.l.b16 %v430
    %v536 = vunpack.c.h.b16 %v430
    %v537 = vunpack.c.l.b16 %v431
    %v538 = vunpack.c.h.b16 %v431
    %v539 = vpack.c.b16 %v477, %v475
    %v540 = vpack.c.b16 %v478, %v476
    %v541 = vpack.c.b16 %v481, %v479
    %v542 = vpack.c.b16 %v482, %v480
    %v543 = vpack.c.b16 %v485, %v483
    %v544 = vpack.c.b16 %v486, %v484
    %v545 = vpack.c.b16 %v489, %v487
    %v546 = vpack.c.b16 %v490, %v488
    %v547 = vpack.c.b16 %v493, %v491
    %v548 = vpack.c.b16 %v494, %v492
    %v549 = vpack.c.b16 %v497, %v495
    %v550 = vpack.c.b16 %v498, %v496
    %v551 = vpack.c.b16 %v501, %v499
    %v552 = vpack.c.b16 %v502, %v500
    %v553 = vpack.c.b16 %v505, %v503
    %v554 = vpack.c.b16 %v506, %v504
    %v555 = vpack.c.b16 %v509, %v507
    %v556 = vpack.c.b16 %v510, %v508
    %v557 = vpack.c.b16 %v513, %v511
    %v558 = vpack.c.b16 %v514, %v512
    %v559 = vpack.c.b16 %v517, %v515
    %v560 = vpack.c.b16 %v518, %v516
    %v561 = vpack.c.b16 %v521, %v519
    %v562 = vpack.c.b16 %v522, %v520
    %v563 = vpack.c.b16 %v525, %v523
    %v564 = vpack.c.b16 %v526, %v524
    %v565 = vpack.c.b16 %v529, %v527
    %v566 = vpack.c.b16 %v530, %v528
    %v567 = vpack.c.b16 %v533, %v531
    %v568 = vpack.c.b16 %v534, %v532
    %v569 = vpack.c.b16 %v537, %v535
    %v570 = vpack.c.b16 %v538, %v536
    %603 = vmatprep.subr.bf16.mxu0 %v540
    %604 = vmatpush1.bf16.msra.mxu0 %v539
    %605 = vmatprep.subr.bf16.mxu0 %v542
    %606 = vmatpush1.bf16.msra.mxu0 %v541
    %607 = vmatprep.subr.bf16.mxu0 %v544
    %608 = vmatpush1.bf16.msra.mxu0 %v543
    %609 = vmatprep.subr.bf16.mxu0 %v546
    %610 = vmatpush1.bf16.msra.mxu0 %v545
    %611 = vmatprep.subr.bf16.mxu0 %v548
    %612 = vmatpush1.bf16.msra.mxu0 %v547
    %613 = vmatprep.subr.bf16.mxu0 %v550
    %614 = vmatpush1.bf16.msra.mxu0 %v549
    %615 = vmatprep.subr.bf16.mxu0 %v552
    %616 = vmatpush1.bf16.msra.mxu0 %v551
    %617 = vmatprep.subr.bf16.mxu0 %v554
    %618 = vmatpush1.bf16.msra.mxu0 %v553
    %619 = vmatprep.subr.bf16.mxu0 %v556
    %620 = vmatpush1.bf16.msra.mxu0 %v555
    %621 = vmatprep.subr.bf16.mxu0 %v558
    %622 = vmatpush1.bf16.msra.mxu0 %v557
    %623 = vmatprep.subr.bf16.mxu0 %v560
    %624 = vmatpush1.bf16.msra.mxu0 %v559
    %625 = vmatprep.subr.bf16.mxu0 %v562
    %626 = vmatpush1.bf16.msra.mxu0 %v561
    %627 = vmatprep.subr.bf16.mxu0 %v564
    %628 = vmatpush1.bf16.msra.mxu0 %v563
    %629 = vmatprep.subr.bf16.mxu0 %v566
    %630 = vmatpush1.bf16.msra.mxu0 %v565
    %631 = vmatprep.subr.bf16.mxu0 %v568
    %632 = vmatpush1.bf16.msra.mxu0 %v567
    %633 = vmatprep.subr.bf16.mxu0 %v570
    %634 = vmatpush1.bf16.msra.mxu0 %v569
    %635 = vmatprep.mubr.bf16.mxu0 %v399
    %636 = vmatmul.mubr.bf16.gmra.mrb[0].mxu0 %v398
    %v637 = vpop.f32.mrb[0].mxu0
    %v638 = vadd.f32 %v436, %v637
    %v639 = vpop.f32.mrb[0].mxu0
    %v640 = vadd.f32 %v440, %v639
    %v641 = vpop.f32.mrb[0].mxu0
    %v642 = vpop.f32.mrb[0].mxu0
    %643 = vdwg.mxu0
    %v644 = vmax.f32 %v638, 0.0
    %v645 = vmax.f32 %v640, 0.0
    %v646 = vpack.c.bf16 %v644, %v644
    %v647 = vpack.c.bf16 %v645, %v645
    %v648 = vld [vmem:[#allocation7] sm:$0xf]
    %v649 = vld [vmem:[#allocation7 + $0x4] sm:$0xf]
    %v650 = vld [vmem:[#allocation7 + $0x8] sm:$0xf]
    %v651 = vld [vmem:[#allocation7 + $0xc] sm:$0xf]
    %v652 = vld [vmem:[#allocation7 + $0x10] sm:$0xf]
    %v653 = vld [vmem:[#allocation7 + $0x14] sm:$0xf]
    %v654 = vld [vmem:[#allocation7 + $0x18] sm:$0xf]
    %v655 = vld [vmem:[#allocation7 + $0x1c] sm:$0xf]
    %v656 = vld [vmem:[#allocation7 + $0x20] sm:$0xf]
    %v657 = vld [vmem:[#allocation7 + $0x24] sm:$0xf]
    %v658 = vld [vmem:[#allocation7 + $0x28] sm:$0xf]
    %v659 = vld [vmem:[#allocation7 + $0x2c] sm:$0xf]
    %v660 = vld [vmem:[#allocation7 + $0x30] sm:$0xf]
    %v661 = vld [vmem:[#allocation7 + $0x34] sm:$0xf]
    %v662 = vld [vmem:[#allocation7 + $0x38] sm:$0xf]
    %v663 = vld [vmem:[#allocation7 + $0x3c] sm:$0xf]
    %v664 = vld [vmem:[#allocation7 + $0x40] sm:$0xf]
    %v665 = vld [vmem:[#allocation7 + $0x44] sm:$0xf]
    %v666 = vld [vmem:[#allocation7 + $0x48] sm:$0xf]
    %v667 = vld [vmem:[#allocation7 + $0x4c] sm:$0xf]
    %v668 = vld [vmem:[#allocation7 + $0x50] sm:$0xf]
    %v669 = vld [vmem:[#allocation7 + $0x54] sm:$0xf]
    %v670 = vld [vmem:[#allocation7 + $0x58] sm:$0xf]
    %v671 = vld [vmem:[#allocation7 + $0x5c] sm:$0xf]
    %v672 = vld [vmem:[#allocation7 + $0x60] sm:$0xf]
    %v673 = vld [vmem:[#allocation7 + $0x64] sm:$0xf]
    %v674 = vld [vmem:[#allocation7 + $0x68] sm:$0xf]
    %v675 = vld [vmem:[#allocation7 + $0x6c] sm:$0xf]
    %v676 = vld [vmem:[#allocation7 + $0x70] sm:$0xf]
    %v677 = vld [vmem:[#allocation7 + $0x74] sm:$0xf]
    %v678 = vld [vmem:[#allocation7 + $0x78] sm:$0xf]
    %v679 = vld [vmem:[#allocation7 + $0x7c] sm:$0xf]
    %v681 = vlaneseq
    %v682 = vshrl.u32 %v681, 7
    %v683 = vsub.s32 0, %v682
    %v684 = vrot.slane %v77, %v683
    %v718 = vunpack.c.l.b16 %v648
    %v719 = vunpack.c.l.b16 %v649
    %v720 = vunpack.c.l.b16 %v650
    %v721 = vunpack.c.l.b16 %v651
    %v722 = vunpack.c.l.b16 %v652
    %v723 = vunpack.c.l.b16 %v653
    %v724 = vunpack.c.l.b16 %v654
    %v725 = vunpack.c.l.b16 %v655
    %v726 = vunpack.c.l.b16 %v656
    %v727 = vunpack.c.l.b16 %v657
    %v728 = vunpack.c.l.b16 %v658
    %v729 = vunpack.c.l.b16 %v659
    %v730 = vunpack.c.l.b16 %v660
    %v731 = vunpack.c.l.b16 %v661
    %v732 = vunpack.c.l.b16 %v662
    %v733 = vunpack.c.l.b16 %v663
    %v734 = vunpack.c.l.b16 %v664
    %v735 = vunpack.c.l.b16 %v665
    %v736 = vunpack.c.l.b16 %v666
    %v737 = vunpack.c.l.b16 %v667
    %v738 = vunpack.c.l.b16 %v668
    %v739 = vunpack.c.l.b16 %v669
    %v740 = vunpack.c.l.b16 %v670
    %v741 = vunpack.c.l.b16 %v671
    %v742 = vunpack.c.l.b16 %v672
    %v743 = vunpack.c.l.b16 %v673
    %v744 = vunpack.c.l.b16 %v674
    %v745 = vunpack.c.l.b16 %v675
    %v746 = vunpack.c.l.b16 %v676
    %v747 = vunpack.c.l.b16 %v677
    %v748 = vunpack.c.l.b16 %v678
    %v749 = vunpack.c.l.b16 %v679
    %v750 = vpack.c.b16 %v719, %v718
    %v751 = vpack.c.b16 %v721, %v720
    %v752 = vpack.c.b16 %v723, %v722
    %v753 = vpack.c.b16 %v725, %v724
    %v754 = vpack.c.b16 %v727, %v726
    %v755 = vpack.c.b16 %v729, %v728
    %v756 = vpack.c.b16 %v731, %v730
    %v757 = vpack.c.b16 %v733, %v732
    %v758 = vpack.c.b16 %v735, %v734
    %v759 = vpack.c.b16 %v737, %v736
    %v760 = vpack.c.b16 %v739, %v738
    %v761 = vpack.c.b16 %v741, %v740
    %v762 = vpack.c.b16 %v743, %v742
    %v763 = vpack.c.b16 %v745, %v744
    %v764 = vpack.c.b16 %v747, %v746
    %v765 = vpack.c.b16 %v749, %v748
    %782 = vmatprep.subr.bf16.mxu0 0
    %783 = vmatpush1.bf16.msra.mxu0 %v750
    %784 = vmatprep.subr.bf16.mxu0 0
    %785 = vmatpush1.bf16.msra.mxu0 %v751
    %786 = vmatprep.subr.bf16.mxu0 0
    %787 = vmatpush1.bf16.msra.mxu0 %v752
    %788 = vmatprep.subr.bf16.mxu0 0
    %789 = vmatpush1.bf16.msra.mxu0 %v753
    %790 = vmatprep.subr.bf16.mxu0 0
    %791 = vmatpush1.bf16.msra.mxu0 %v754
    %792 = vmatprep.subr.bf16.mxu0 0
    %793 = vmatpush1.bf16.msra.mxu0 %v755
    %794 = vmatprep.subr.bf16.mxu0 0
    %795 = vmatpush1.bf16.msra.mxu0 %v756
    %796 = vmatprep.subr.bf16.mxu0 0
    %797 = vmatpush1.bf16.msra.mxu0 %v757
    %798 = vmatprep.subr.bf16.mxu0 0
    %799 = vmatpush1.bf16.msra.mxu0 %v758
    %800 = vmatprep.subr.bf16.mxu0 0
    %801 = vmatpush1.bf16.msra.mxu0 %v759
    %802 = vmatprep.subr.bf16.mxu0 0
    %803 = vmatpush1.bf16.msra.mxu0 %v760
    %804 = vmatprep.subr.bf16.mxu0 0
    %805 = vmatpush1.bf16.msra.mxu0 %v761
    %806 = vmatprep.subr.bf16.mxu0 0
    %807 = vmatpush1.bf16.msra.mxu0 %v762
    %808 = vmatprep.subr.bf16.mxu0 0
    %809 = vmatpush1.bf16.msra.mxu0 %v763
    %810 = vmatprep.subr.bf16.mxu0 0
    %811 = vmatpush1.bf16.msra.mxu0 %v764
    %812 = vmatprep.subr.bf16.mxu0 0
    %813 = vmatpush1.bf16.msra.mxu0 %v765
    %814 = vmatprep.mubr.bf16.mxu0 %v647
    %815 = vmatmul.mubr.bf16.gmra.mrb[0].mxu0 %v646
    %v816 = vpop.f32.mrb[0].mxu0
    %v817 = vadd.f32 %v684, %v816
    %v818 = vpop.f32.mrb[0].mxu0
    %v819 = vpop.f32.mrb[0].mxu0
    %v820 = vpop.f32.mrb[0].mxu0
    %821 = vdwg.mxu0
    %822 = vst [vmem:[%s5] sm:$0xff] %v817
    // Predicated region
    $region38: #{_qnetwork_forward_impl.1} parent=1 // pred_check
      _
    $region39: #{_qnetwork_forward_impl.1} parent=1 // pred_check_branch
      %824 = sbr.rel (0) target = $region41
    $region40: #{_qnetwork_forward_impl.1} parent=1 // pred_region
      _
    $region41: #{_qnetwork_forward_impl.1} parent=1 // pred_fallthru
      _
    // Predicated region
    $region42: #{_qnetwork_forward_impl.1} parent=1 // pred_check
      _
    $region43: #{_qnetwork_forward_impl.1} parent=1 // pred_check_branch
      %826 = sbr.rel (0) target = $region45
    $region44: #{_qnetwork_forward_impl.1} parent=1 // pred_region
      _
    $region45: #{_qnetwork_forward_impl.1} parent=1 // pred_fallthru
      _
    %827 = vsyncpa [#allocation3], 1
    %828 = vsyncpa [#allocation5], 1
    %829 = vsyncpa [#allocation8], 1

</llo_original>
